<compile_context>
chip_gen: v6e
topology: v6e:2x2x1
jax: 0.10.0
libtpu: 0.0.40
codegen_flags: <defaults>
</compile_context>

<pallas_src>
import functools
import math

import numpy as np
import jax
import jax.numpy as jnp
from jax.experimental import pallas as pl
from jax.experimental.pallas import tpu as pltpu  # noqa: F401 (TPU backend module)

# ----------------------------- model config ---------------------------------
B = 2            # batch
S = 8            # sequence_size
F = 32           # feature_size
H = 4            # num_heads
D = F // H       # head_size
NEG_BIG = -1e30  # finite "minus infinity" for masking (avoid -inf NaN hazard)


# ------------------------------ the kernel ----------------------------------
def make_attn_kernel(batch, seq, feat, heads):
    head = feat // heads
    bs = batch * seq

    def kernel(q_ref, k_ref, v_ref, mask_ref, wqkv_ref, bqkv_ref,
               wo_ref, bo_ref, o_ref):
        # Flatten batch into rows: (B, S, F) -> (B*S, F). Leading-dim reshape only.
        qf = q_ref[...].reshape(bs, feat)
        kf = k_ref[...].reshape(bs, feat)
        vf = v_ref[...].reshape(bs, feat)

        # Fused Q/K/V projection: one (3*BS, F) @ (F, 3F) matmul instead of three.
        # Row block r holds input r; we read only the diagonal (row-block, col-block)
        # pairs, so each projection sees its own input and its own bias columns.
        x = jnp.concatenate([qf, kf, vf], axis=0)                     # (3*BS, F)
        y = jnp.dot(x, wqkv_ref[...],
                    preferred_element_type=jnp.float32) + bqkv_ref[...]

        q = y[0 * bs:1 * bs, 0 * feat:1 * feat]   # already scaled by 1/sqrt(head)
        k = y[1 * bs:2 * bs, 1 * feat:2 * feat]
        v = y[2 * bs:3 * bs, 2 * feat:3 * feat]

        mask = mask_ref[...]                       # (BS, BS) block-diag additive mask

        head_outs = []
        for h in range(heads):                     # static unroll over heads
            sl = slice(h * head, (h + 1) * head)
            qh, kh, vh = q[:, sl], k[:, sl], v[:, sl]
            s = jnp.dot(qh, kh.T, preferred_element_type=jnp.float32) + mask
            s = s - jnp.max(s, axis=-1, keepdims=True)
            e = jnp.exp(s)
            inv = pl.reciprocal(jnp.sum(e, axis=-1, keepdims=True), approx=True)
            head_outs.append(jnp.dot(e * inv, vh,
                                     preferred_element_type=jnp.float32))
        attn = jnp.concatenate(head_outs, axis=-1)                    # (BS, F)

        # Output projection (resid_dropout = identity).
        out = jnp.dot(attn, wo_ref[...],
                      preferred_element_type=jnp.float32) + bo_ref[...]
        o_ref[...] = out.reshape(batch, seq, feat)

    return kernel


# ------------------------------ wrapper --------------------------------------
@functools.partial(jax.jit, static_argnames=("num_heads",))
def _attn_jit(q, k, v, mask_ss, w_qkv, b_qkv, w_o, b_o, *, num_heads):
    """Full forward under one jit: mask construction fuses with the pallas_call."""
    b, s, f = q.shape
    bs = b * s

    # Block-diagonal additive mask over the flattened (B*S, B*S) score matrix:
    # a query row may only attend to keys of its own batch. Within a diagonal
    # block the (optional) user mask is applied, exactly like the torch module.
    rows = np.arange(bs) // s                      # compile-time constant
    same = jnp.asarray(rows[:, None] == rows[None, :])
    mask_bd = jnp.where(same,
                        jnp.tile(mask_ss.astype(jnp.float32), (b, b)),
                        jnp.float32(NEG_BIG))

    def full_spec(shape):
        nd = len(shape)
        return pl.BlockSpec(shape, lambda _nd=nd: (0,) * _nd)

    operands = (q, k, v, mask_bd, w_qkv, b_qkv, w_o, b_o)
    kernel = make_attn_kernel(b, s, f, num_heads)
    return pl.pallas_call(
        kernel,
        out_shape=jax.ShapeDtypeStruct((b, s, f), jnp.float32),
        in_specs=[full_spec(a.shape) for a in operands],
        out_specs=full_spec((b, s, f)),
    )(*operands)


def custom_attn_forward(q, k, v, fused, mask=None):
    """q, k, v: (B, S, F) float32. fused: prepared parameter dict. mask: (S, S) or None."""
    _, s, _ = q.shape
    mask_ss = (jnp.zeros((s, s), jnp.float32) if mask is None
               else mask.astype(jnp.float32))
    return _attn_jit(q, k, v, mask_ss,
                     fused["w_qkv"], fused["b_qkv"], fused["w_o"], fused["b_o"],
                     num_heads=fused["num_heads"])


# --------------------------- parameter creation -------------------------------
def init_params(key, feature_size):
    """Xavier-uniform-ish Linear weights stored as (in, out); small random biases."""
    def xavier(k, fan_in, fan_out, shape):
        limit = math.sqrt(6.0 / (fan_in + fan_out))
        return jax.random.uniform(k, shape, jnp.float32, -limit, limit)

    keys = jax.random.split(key, 8)
    p = {}
    for i, name in enumerate(["wq", "wk", "wv", "wo"]):
        p[name] = xavier(keys[i], feature_size, feature_size,
                         (feature_size, feature_size))
    for i, name in enumerate(["bq", "bk", "bv", "bo"]):
        p[name] = 0.01 * jax.random.normal(keys[4 + i], (1, feature_size), jnp.float32)
    return p


def prepare_fused_params(p, num_heads):
    """One-time host-side prep: fold 1/sqrt(head) into Wq/bq and concat [Wq|Wk|Wv]."""
    feat = p["wq"].shape[0]
    scale = 1.0 / math.sqrt(feat // num_heads)
    return {
        "num_heads": num_heads,
        "w_qkv": jnp.concatenate([p["wq"] * scale, p["wk"], p["wv"]], axis=1),  # (F,3F)
        "b_qkv": jnp.concatenate([p["bq"] * scale, p["bk"], p["bv"]], axis=1),  # (1,3F)
        "w_o": p["wo"],
        "b_o": p["bo"],
    }


# ------------------------- pure-JAX reference (check) -------------------------
def reference_forward(q, k, v, p, num_heads, mask=None):
    b, s, f = q.shape
    d = f // num_heads

    def split(x):
        return x.reshape(b, s, num_heads, d).transpose(0, 2, 1, 3)

    Q = split(q @ p["wq"] + p["bq"])
    K = split(k @ p["wk"] + p["bk"])
    V = split(v @ p["wv"] + p["bv"])
    scores = jnp.einsum("bhqd,bhkd->bhqk", Q, K) / math.sqrt(d)
    if mask is not None:
        scores = scores + mask
    probs = jax.nn.softmax(scores, axis=-1)
    ctx = jnp.einsum("bhqk,bhkd->bhqd", probs, V)
    ctx = ctx.transpose(0, 2, 1, 3).reshape(b, s, f)
    return ctx @ p["wo"] + p["bo"]


# --------------------------------- main ---------------------------------------
if __name__ == "__main__":
    key = jax.random.PRNGKey(0)
    kq, kk, kv, kp = jax.random.split(key, 4)
    q = jax.random.normal(kq, (B, S, F), jnp.float32)
    k = jax.random.normal(kk, (B, S, F), jnp.float32)
    v = jax.random.normal(kv, (B, S, F), jnp.float32)

    params = init_params(kp, F)
    fused = prepare_fused_params(params, H)

    # Typical usage: causal additive mask (finite large-negative, not -inf).
    causal = jnp.where(jnp.arange(S)[None, :] > jnp.arange(S)[:, None],
                       -1e9, 0.0).astype(jnp.float32)

    out_masked = jax.block_until_ready(custom_attn_forward(q, k, v, fused, mask=causal))
    out_nomask = jax.block_until_ready(custom_attn_forward(q, k, v, fused, mask=None))

    ref_masked = jax.block_until_ready(reference_forward(q, k, v, params, H, mask=causal))
    ref_nomask = jax.block_until_ready(reference_forward(q, k, v, params, H, mask=None))

    assert out_masked.shape == (B, S, F)
    # Tolerance accounts for pl.reciprocal(approx=True) in the softmax normalization.
    np.testing.assert_allclose(np.asarray(out_masked), np.asarray(ref_masked),
                               rtol=5e-3, atol=5e-3)
    np.testing.assert_allclose(np.asarray(out_nomask), np.asarray(ref_nomask),
                               rtol=5e-3, atol=5e-3)

    print("KERNEL_OK")
</pallas_src>

<mosaic_0001>
module attributes {stable_mosaic.version = 11 : i64} {
  func.func @kernel(%arg0: memref<2x8x32xf32, #tpu.memory_space<vmem>>, %arg1: memref<2x8x32xf32, #tpu.memory_space<vmem>>, %arg2: memref<2x8x32xf32, #tpu.memory_space<vmem>>, %arg3: memref<16x16xf32, #tpu.memory_space<vmem>>, %arg4: memref<32x96xf32, #tpu.memory_space<vmem>>, %arg5: memref<1x96xf32, #tpu.memory_space<vmem>>, %arg6: memref<32x32xf32, #tpu.memory_space<vmem>>, %arg7: memref<1x32xf32, #tpu.memory_space<vmem>>, %arg8: memref<2x8x32xf32, #tpu.memory_space<vmem>>) attributes {dimension_semantics = [], scalar_prefetch = 0 : i64, scratch_operands = 0 : i64, tpu.core_type = #tpu.core_type<tc>} {
    %c0 = arith.constant 0 : index
    %c0_0 = arith.constant 0 : index
    %c0_1 = arith.constant 0 : index
    %0 = vector.load %arg0[%c0, %c0_0, %c0_1] : memref<2x8x32xf32, #tpu.memory_space<vmem>>, vector<2x8x32xf32>
    %1 = vector.shape_cast %0 : vector<2x8x32xf32> to vector<16x32xf32>
    %c0_2 = arith.constant 0 : index
    %c0_3 = arith.constant 0 : index
    %c0_4 = arith.constant 0 : index
    %2 = vector.load %arg1[%c0_2, %c0_3, %c0_4] : memref<2x8x32xf32, #tpu.memory_space<vmem>>, vector<2x8x32xf32>
    %3 = vector.shape_cast %2 : vector<2x8x32xf32> to vector<16x32xf32>
    %c0_5 = arith.constant 0 : index
    %c0_6 = arith.constant 0 : index
    %c0_7 = arith.constant 0 : index
    %4 = vector.load %arg2[%c0_5, %c0_6, %c0_7] : memref<2x8x32xf32, #tpu.memory_space<vmem>>, vector<2x8x32xf32>
    %5 = vector.shape_cast %4 : vector<2x8x32xf32> to vector<16x32xf32>
    %6 = tpu.concatenate %1, %3, %5 in 0 : vector<16x32xf32>, vector<16x32xf32>, vector<16x32xf32> -> vector<48x32xf32>
    %c0_8 = arith.constant 0 : index
    %c0_9 = arith.constant 0 : index
    %7 = vector.load %arg4[%c0_8, %c0_9] : memref<32x96xf32, #tpu.memory_space<vmem>>, vector<32x96xf32>
    %cst = arith.constant dense<0.000000e+00> : vector<48x96xf32>
    %8 = tpu.matmul %6, %7, %cst {dimension_numbers = #tpu.dot_dimension_numbers<[1], [0], [0], [1], [0, 0, 1, 1], [], []>} : vector<48x32xf32>, vector<32x96xf32>, vector<48x96xf32> -> vector<48x96xf32>
    %c0_10 = arith.constant 0 : index
    %c0_11 = arith.constant 0 : index
    %9 = vector.load %arg5[%c0_10, %c0_11] : memref<1x96xf32, #tpu.memory_space<vmem>>, vector<1x96xf32>
    %10 = vector.broadcast %9 : vector<1x96xf32> to vector<48x96xf32>
    %11 = arith.addf %8, %10 : vector<48x96xf32>
    %12 = vector.extract_strided_slice %11 {offsets = [0, 0], sizes = [16, 32], strides = [1, 1]} : vector<48x96xf32> to vector<16x32xf32>
    %13 = vector.extract_strided_slice %11 {offsets = [16, 32], sizes = [16, 32], strides = [1, 1]} : vector<48x96xf32> to vector<16x32xf32>
    %14 = vector.extract_strided_slice %11 {offsets = [32, 64], sizes = [16, 32], strides = [1, 1]} : vector<48x96xf32> to vector<16x32xf32>
    %c0_12 = arith.constant 0 : index
    %c0_13 = arith.constant 0 : index
    %15 = vector.load %arg3[%c0_12, %c0_13] : memref<16x16xf32, #tpu.memory_space<vmem>>, vector<16x16xf32>
    %16 = vector.extract_strided_slice %12 {offsets = [0, 0], sizes = [16, 8], strides = [1, 1]} : vector<16x32xf32> to vector<16x8xf32>
    %17 = vector.extract_strided_slice %13 {offsets = [0, 0], sizes = [16, 8], strides = [1, 1]} : vector<16x32xf32> to vector<16x8xf32>
    %18 = vector.extract_strided_slice %14 {offsets = [0, 0], sizes = [16, 8], strides = [1, 1]} : vector<16x32xf32> to vector<16x8xf32>
    %19 = tpu.transpose %17, [1, 0] : vector<16x8xf32> -> vector<8x16xf32>
    %cst_14 = arith.constant dense<0.000000e+00> : vector<16x16xf32>
    %20 = tpu.matmul %16, %19, %cst_14 {dimension_numbers = #tpu.dot_dimension_numbers<[1], [0], [0], [1], [0, 0, 1, 1], [], []>} : vector<16x8xf32>, vector<8x16xf32>, vector<16x16xf32> -> vector<16x16xf32>
    %21 = arith.addf %20, %15 : vector<16x16xf32>
    %cst_15 = arith.constant dense<0xFF800000> : vector<16xf32>
    %22 = vector.multi_reduction <maximumf>, %21, %cst_15 [1] : vector<16x16xf32> to vector<16xf32>
    %23 = vector.shape_cast %22 : vector<16xf32> to vector<16x1xf32>
    %24 = vector.broadcast %23 : vector<16x1xf32> to vector<16x16xf32>
    %25 = arith.subf %21, %24 : vector<16x16xf32>
    %26 = math.exp %25 : vector<16x16xf32>
    %cst_16 = arith.constant dense<0.000000e+00> : vector<16xf32>
    %27 = vector.multi_reduction <add>, %26, %cst_16 [1] : vector<16x16xf32> to vector<16xf32>
    %28 = vector.shape_cast %27 : vector<16xf32> to vector<16x1xf32>
    %29 = tpu.reciprocal %28 {approx = true} : vector<16x1xf32> -> vector<16x1xf32>
    %30 = vector.broadcast %29 : vector<16x1xf32> to vector<16x16xf32>
    %31 = arith.mulf %26, %30 : vector<16x16xf32>
    %cst_17 = arith.constant dense<0.000000e+00> : vector<16x8xf32>
    %32 = tpu.matmul %31, %18, %cst_17 {dimension_numbers = #tpu.dot_dimension_numbers<[1], [0], [0], [1], [0, 0, 1, 1], [], []>} : vector<16x16xf32>, vector<16x8xf32>, vector<16x8xf32> -> vector<16x8xf32>
    %33 = vector.extract_strided_slice %12 {offsets = [0, 8], sizes = [16, 8], strides = [1, 1]} : vector<16x32xf32> to vector<16x8xf32>
    %34 = vector.extract_strided_slice %13 {offsets = [0, 8], sizes = [16, 8], strides = [1, 1]} : vector<16x32xf32> to vector<16x8xf32>
    %35 = vector.extract_strided_slice %14 {offsets = [0, 8], sizes = [16, 8], strides = [1, 1]} : vector<16x32xf32> to vector<16x8xf32>
    %36 = tpu.transpose %34, [1, 0] : vector<16x8xf32> -> vector<8x16xf32>
    %cst_18 = arith.constant dense<0.000000e+00> : vector<16x16xf32>
    %37 = tpu.matmul %33, %36, %cst_18 {dimension_numbers = #tpu.dot_dimension_numbers<[1], [0], [0], [1], [0, 0, 1, 1], [], []>} : vector<16x8xf32>, vector<8x16xf32>, vector<16x16xf32> -> vector<16x16xf32>
    %38 = arith.addf %37, %15 : vector<16x16xf32>
    %cst_19 = arith.constant dense<0xFF800000> : vector<16xf32>
    %39 = vector.multi_reduction <maximumf>, %38, %cst_19 [1] : vector<16x16xf32> to vector<16xf32>
    %40 = vector.shape_cast %39 : vector<16xf32> to vector<16x1xf32>
    %41 = vector.broadcast %40 : vector<16x1xf32> to vector<16x16xf32>
    %42 = arith.subf %38, %41 : vector<16x16xf32>
    %43 = math.exp %42 : vector<16x16xf32>
    %cst_20 = arith.constant dense<0.000000e+00> : vector<16xf32>
    %44 = vector.multi_reduction <add>, %43, %cst_20 [1] : vector<16x16xf32> to vector<16xf32>
    %45 = vector.shape_cast %44 : vector<16xf32> to vector<16x1xf32>
    %46 = tpu.reciprocal %45 {approx = true} : vector<16x1xf32> -> vector<16x1xf32>
    %47 = vector.broadcast %46 : vector<16x1xf32> to vector<16x16xf32>
    %48 = arith.mulf %43, %47 : vector<16x16xf32>
    %cst_21 = arith.constant dense<0.000000e+00> : vector<16x8xf32>
    %49 = tpu.matmul %48, %35, %cst_21 {dimension_numbers = #tpu.dot_dimension_numbers<[1], [0], [0], [1], [0, 0, 1, 1], [], []>} : vector<16x16xf32>, vector<16x8xf32>, vector<16x8xf32> -> vector<16x8xf32>
    %50 = vector.extract_strided_slice %12 {offsets = [0, 16], sizes = [16, 8], strides = [1, 1]} : vector<16x32xf32> to vector<16x8xf32>
    %51 = vector.extract_strided_slice %13 {offsets = [0, 16], sizes = [16, 8], strides = [1, 1]} : vector<16x32xf32> to vector<16x8xf32>
    %52 = vector.extract_strided_slice %14 {offsets = [0, 16], sizes = [16, 8], strides = [1, 1]} : vector<16x32xf32> to vector<16x8xf32>
    %53 = tpu.transpose %51, [1, 0] : vector<16x8xf32> -> vector<8x16xf32>
    %cst_22 = arith.constant dense<0.000000e+00> : vector<16x16xf32>
    %54 = tpu.matmul %50, %53, %cst_22 {dimension_numbers = #tpu.dot_dimension_numbers<[1], [0], [0], [1], [0, 0, 1, 1], [], []>} : vector<16x8xf32>, vector<8x16xf32>, vector<16x16xf32> -> vector<16x16xf32>
    %55 = arith.addf %54, %15 : vector<16x16xf32>
    %cst_23 = arith.constant dense<0xFF800000> : vector<16xf32>
    %56 = vector.multi_reduction <maximumf>, %55, %cst_23 [1] : vector<16x16xf32> to vector<16xf32>
    %57 = vector.shape_cast %56 : vector<16xf32> to vector<16x1xf32>
    %58 = vector.broadcast %57 : vector<16x1xf32> to vector<16x16xf32>
    %59 = arith.subf %55, %58 : vector<16x16xf32>
    %60 = math.exp %59 : vector<16x16xf32>
    %cst_24 = arith.constant dense<0.000000e+00> : vector<16xf32>
    %61 = vector.multi_reduction <add>, %60, %cst_24 [1] : vector<16x16xf32> to vector<16xf32>
    %62 = vector.shape_cast %61 : vector<16xf32> to vector<16x1xf32>
    %63 = tpu.reciprocal %62 {approx = true} : vector<16x1xf32> -> vector<16x1xf32>
    %64 = vector.broadcast %63 : vector<16x1xf32> to vector<16x16xf32>
    %65 = arith.mulf %60, %64 : vector<16x16xf32>
    %cst_25 = arith.constant dense<0.000000e+00> : vector<16x8xf32>
    %66 = tpu.matmul %65, %52, %cst_25 {dimension_numbers = #tpu.dot_dimension_numbers<[1], [0], [0], [1], [0, 0, 1, 1], [], []>} : vector<16x16xf32>, vector<16x8xf32>, vector<16x8xf32> -> vector<16x8xf32>
    %67 = vector.extract_strided_slice %12 {offsets = [0, 24], sizes = [16, 8], strides = [1, 1]} : vector<16x32xf32> to vector<16x8xf32>
    %68 = vector.extract_strided_slice %13 {offsets = [0, 24], sizes = [16, 8], strides = [1, 1]} : vector<16x32xf32> to vector<16x8xf32>
    %69 = vector.extract_strided_slice %14 {offsets = [0, 24], sizes = [16, 8], strides = [1, 1]} : vector<16x32xf32> to vector<16x8xf32>
    %70 = tpu.transpose %68, [1, 0] : vector<16x8xf32> -> vector<8x16xf32>
    %cst_26 = arith.constant dense<0.000000e+00> : vector<16x16xf32>
    %71 = tpu.matmul %67, %70, %cst_26 {dimension_numbers = #tpu.dot_dimension_numbers<[1], [0], [0], [1], [0, 0, 1, 1], [], []>} : vector<16x8xf32>, vector<8x16xf32>, vector<16x16xf32> -> vector<16x16xf32>
    %72 = arith.addf %71, %15 : vector<16x16xf32>
    %cst_27 = arith.constant dense<0xFF800000> : vector<16xf32>
    %73 = vector.multi_reduction <maximumf>, %72, %cst_27 [1] : vector<16x16xf32> to vector<16xf32>
    %74 = vector.shape_cast %73 : vector<16xf32> to vector<16x1xf32>
    %75 = vector.broadcast %74 : vector<16x1xf32> to vector<16x16xf32>
    %76 = arith.subf %72, %75 : vector<16x16xf32>
    %77 = math.exp %76 : vector<16x16xf32>
    %cst_28 = arith.constant dense<0.000000e+00> : vector<16xf32>
    %78 = vector.multi_reduction <add>, %77, %cst_28 [1] : vector<16x16xf32> to vector<16xf32>
    %79 = vector.shape_cast %78 : vector<16xf32> to vector<16x1xf32>
    %80 = tpu.reciprocal %79 {approx = true} : vector<16x1xf32> -> vector<16x1xf32>
    %81 = vector.broadcast %80 : vector<16x1xf32> to vector<16x16xf32>
    %82 = arith.mulf %77, %81 : vector<16x16xf32>
    %cst_29 = arith.constant dense<0.000000e+00> : vector<16x8xf32>
    %83 = tpu.matmul %82, %69, %cst_29 {dimension_numbers = #tpu.dot_dimension_numbers<[1], [0], [0], [1], [0, 0, 1, 1], [], []>} : vector<16x16xf32>, vector<16x8xf32>, vector<16x8xf32> -> vector<16x8xf32>
    %84 = tpu.concatenate %32, %49, %66, %83 in 1 : vector<16x8xf32>, vector<16x8xf32>, vector<16x8xf32>, vector<16x8xf32> -> vector<16x32xf32>
    %c0_30 = arith.constant 0 : index
    %c0_31 = arith.constant 0 : index
    %85 = vector.load %arg6[%c0_30, %c0_31] : memref<32x32xf32, #tpu.memory_space<vmem>>, vector<32x32xf32>
    %cst_32 = arith.constant dense<0.000000e+00> : vector<16x32xf32>
    %86 = tpu.matmul %84, %85, %cst_32 {dimension_numbers = #tpu.dot_dimension_numbers<[1], [0], [0], [1], [0, 0, 1, 1], [], []>} : vector<16x32xf32>, vector<32x32xf32>, vector<16x32xf32> -> vector<16x32xf32>
    %c0_33 = arith.constant 0 : index
    %c0_34 = arith.constant 0 : index
    %87 = vector.load %arg7[%c0_33, %c0_34] : memref<1x32xf32, #tpu.memory_space<vmem>>, vector<1x32xf32>
    %88 = vector.broadcast %87 : vector<1x32xf32> to vector<16x32xf32>
    %89 = arith.addf %86, %88 : vector<16x32xf32>
    %90 = vector.shape_cast %89 : vector<16x32xf32> to vector<2x8x32xf32>
    %c0_35 = arith.constant 0 : index
    %c0_36 = arith.constant 0 : index
    %c0_37 = arith.constant 0 : index
    %91 = vector.load %arg8[%c0_35, %c0_36, %c0_37] : memref<2x8x32xf32, #tpu.memory_space<vmem>>, vector<2x8x32xf32>
    tpu.vector_store %arg8[%c0_35, %c0_36, %c0_37], %90 {strides = array<i32>} : memref<2x8x32xf32, #tpu.memory_space<vmem>>, vector<2x8x32xf32>,
    return
  }
}

</mosaic_0001>

<llo_original>
// kernel: _attn_jit.1
$region0: #{_attn_jit.1}
  #allocation0 [shape = 'u32[]', space=smem, size = 0x4, offset = 0x4, fixed_abs, tag = 'smem constant byte address 0x4 - core index']
  #allocation1 [shape = 'u32[144,128]{1,0:T(1,128)}', space=vmem, size = 0x12000, scoped, tag = 'internal scratch']
  %s0 = inlined_call_operand.vmem [shape: f32[2,8,32], index: 0, kind: input, shape index: {}]
  %s1 = inlined_call_operand.vmem [shape: f32[2,8,32], index: 1, kind: input, shape index: {}]
  %s2 = inlined_call_operand.hbm [shape: f32[2,8,32], index: 2, kind: input, shape index: {}]
  %s3 = inlined_call_operand.vmem [shape: f32[16,16], index: 3, kind: input, shape index: {}]
  %s4 = inlined_call_operand.vmem [shape: f32[32,96], index: 4, kind: input, shape index: {}]
  %s5 = inlined_call_operand.vmem [shape: f32[1,96], index: 5, kind: input, shape index: {}]
  %s6 = inlined_call_operand.vmem [shape: f32[32,32], index: 6, kind: input, shape index: {}]
  %s7 = inlined_call_operand.vmem [shape: f32[1,32], index: 7, kind: input, shape index: {}]
  %s8 = inlined_call_operand.hbm [shape: f32[2,8,32], index: 8, kind: output, shape index: {}]
  %s9 = sld [smem:[#allocation0]]
  $region46: #{_attn_jit.1} parent=0
    _
  %s11 = ssub.s32 1, %s9
  %s12 = scalar_select 0, %s11, %s9
  $region1: #{_attn_jit.1} parent=0
    #allocation2 [shape = 'u8[8192]{0}', space=vmem, size = 0x2000, scoped, tag = 'input window, operand 2, single buffered']
    #allocation3 [shape = 's32[1]{0}', space=sflag, size = 0x4, scoped, tag = 'scoped memory for _attn_jit.1']
    #allocation4 [shape = 's32[1]{0}', space=sflag, size = 0x4, scoped, tag = 'scoped memory for _attn_jit.1']
    #allocation5 [shape = 'u8[8192]{0}', space=vmem, size = 0x2000, scoped, tag = 'output window, operand 0, single buffered']
    %13 = vsyncpa [#allocation3], 0
    %14 = vsyncpa [#allocation4], 0
    // Predicated region
    $region2: #{_attn_jit.1} parent=1 // pred_check
      _
    $region3: #{_attn_jit.1} parent=1 // pred_check_branch
      %16 = sbr.rel (0) target = $region5
    $region4: #{_attn_jit.1} parent=1 // pred_region
      _
    $region5: #{_attn_jit.1} parent=1 // pred_fallthru
      _
    // Predicated region
    $region6: #{_attn_jit.1} parent=1 // pred_check
      _
    $region7: #{_attn_jit.1} parent=1 // pred_check_branch
      %18 = sbr.rel (0) target = $region9
    $region8: #{_attn_jit.1} parent=1 // pred_region
      _
    $region9: #{_attn_jit.1} parent=1 // pred_fallthru
      _
    // Predicated region
    $region10: #{_attn_jit.1} parent=1 // pred_check
      _
    $region11: #{_attn_jit.1} parent=1 // pred_check_branch
      %20 = sbr.rel (0) target = $region13
    $region12: #{_attn_jit.1} parent=1 // pred_region
      %s22 = ssub.s32 256, 256
      %23 = vsyncadd [#allocation3], %s22
      %s24 = sshll.u32 [#allocation2], 4
      %s25 = int_to_ptr.vmem [resolvable:$true] %s24
      %30 = dma.hbm_to_vmem [thread:$0]  %s2, 256, %s25, [#allocation3], 128, 128, 8
    $region13: #{_attn_jit.1} parent=1 // pred_fallthru
      _
    // Predicated region
    $region14: #{_attn_jit.1} parent=1 // pred_check
      _
    $region15: #{_attn_jit.1} parent=1 // pred_check_branch
      %32 = sbr.rel (0) target = $region17
    $region16: #{_attn_jit.1} parent=1 // pred_region
      _
    $region17: #{_attn_jit.1} parent=1 // pred_fallthru
      _
    // Predicated region
    $region18: #{_attn_jit.1} parent=1 // pred_check
      _
    $region19: #{_attn_jit.1} parent=1 // pred_check_branch
      %34 = sbr.rel (0) target = $region21
    $region20: #{_attn_jit.1} parent=1 // pred_region
      _
    $region21: #{_attn_jit.1} parent=1 // pred_fallthru
      _
    // Predicated region
    $region22: #{_attn_jit.1} parent=1 // pred_check
      _
    $region23: #{_attn_jit.1} parent=1 // pred_check_branch
      %36 = sbr.rel (0) target = $region25
    $region24: #{_attn_jit.1} parent=1 // pred_region
      _
    $region25: #{_attn_jit.1} parent=1 // pred_fallthru
      _
    // Predicated region
    $region26: #{_attn_jit.1} parent=1 // pred_check
      _
    $region27: #{_attn_jit.1} parent=1 // pred_check_branch
      %38 = sbr.rel (0) target = $region29
    $region28: #{_attn_jit.1} parent=1 // pred_region
      _
    $region29: #{_attn_jit.1} parent=1 // pred_fallthru
      _
    // Predicated region
    $region30: #{_attn_jit.1} parent=1 // pred_check
      _
    $region31: #{_attn_jit.1} parent=1 // pred_check_branch
      %40 = sbr.rel (0) target = $region33
    $region32: #{_attn_jit.1} parent=1 // pred_region
      _
    $region33: #{_attn_jit.1} parent=1 // pred_fallthru
      _
    // Predicated region
    $region34: #{_attn_jit.1} parent=1 // pred_check
      _
    $region35: #{_attn_jit.1} parent=1 // pred_check_branch
      %42 = sbr.rel (0) target = $region37
    $region36: #{_attn_jit.1} parent=1 // pred_region
      %43 = dma.done [#allocation3], 256
    $region37: #{_attn_jit.1} parent=1 // pred_fallthru
      _
    %v44 = vld [vmem:[%s0] sm:$0xff]
    %v45 = vld [vmem:[%s0 + $0x8] sm:$0xff]
    %v46 = vld [vmem:[%s1] sm:$0xff]
    %v47 = vld [vmem:[%s1 + $0x8] sm:$0xff]
    %v48 = vld [vmem:[#allocation2] sm:$0xff]
    %v49 = vld [vmem:[#allocation2 + $0x8] sm:$0xff]
    %v50 = vld [vmem:[%s4] sm:$0xff]
    %v51 = vld [vmem:[%s4 + $0x8] sm:$0xff]
    %v52 = vld [vmem:[%s4 + $0x10] sm:$0xff]
    %v53 = vld [vmem:[%s4 + $0x18] sm:$0xff]
    %v54 = vld [vmem:[%s5] sm:$0x1]
    %v56 = vlaneseq
    %v57 = vshrl.u32 %v56, 7
    %v58 = vsub.s32 0, %v57
    %v59 = vrot.slane %v54, %v58
    %vm61 = vcmask 261120
    %v63 = vsel %vm61, %v44, 0
    %v66 = vsel %vm61, %v45, 0
    %v69 = vsel %vm61, %v46, 0
    %v72 = vsel %vm61, %v47, 0
    %v75 = vsel %vm61, %v48, 0
    %v78 = vsel %vm61, %v49, 0
    %80 = vmatprep.subr.mxu0 0.0
    %81 = vmatpush1.msra.mxu0 0.0
    %82 = vmatprep.subr.mxu0 0.0
    %83 = vmatpush1.msra.mxu0 0.0
    %84 = vmatprep.subr.mxu0 0.0
    %85 = vmatpush1.msra.mxu0 0.0
    %86 = vmatprep.subr.mxu0 0.0
    %87 = vmatpush1.msra.mxu0 0.0
    %88 = vmatprep.subr.mxu0 0.0
    %89 = vmatpush1.msra.mxu0 0.0
    %90 = vmatprep.subr.mxu0 0.0
    %91 = vmatpush1.msra.mxu0 0.0
    %92 = vmatprep.subr.mxu0 0.0
    %93 = vmatpush1.msra.mxu0 0.0
    %94 = vmatprep.subr.mxu0 0.0
    %95 = vmatpush1.msra.mxu0 0.0
    %96 = vmatprep.subr.mxu0 0.0
    %97 = vmatpush1.msra.mxu0 0.0
    %98 = vmatprep.subr.mxu0 0.0
    %99 = vmatpush1.msra.mxu0 0.0
    %100 = vmatprep.subr.mxu0 0.0
    %101 = vmatpush1.msra.mxu0 0.0
    %102 = vmatprep.subr.mxu0 0.0
    %103 = vmatpush1.msra.mxu0 0.0
    %104 = vmatprep.subr.mxu0 0.0
    %105 = vmatpush1.msra.mxu0 %v53
    %106 = vmatprep.subr.mxu0 0.0
    %107 = vmatpush1.msra.mxu0 %v52
    %108 = vmatprep.subr.mxu0 0.0
    %109 = vmatpush1.msra.mxu0 %v51
    %110 = vmatprep.subr.mxu0 0.0
    %111 = vmatpush1.msra.mxu0 %v50
    %112 = vmatprep.subr.mxu0 0.0
    %113 = vmatpush2.msra.mxu0 0.0
    %114 = vmatprep.subr.mxu0 0.0
    %115 = vmatpush2.msra.mxu0 0.0
    %116 = vmatprep.subr.mxu0 0.0
    %117 = vmatpush2.msra.mxu0 0.0
    %118 = vmatprep.subr.mxu0 0.0
    %119 = vmatpush2.msra.mxu0 0.0
    %120 = vmatprep.subr.mxu0 0.0
    %121 = vmatpush2.msra.mxu0 0.0
    %122 = vmatprep.subr.mxu0 0.0
    %123 = vmatpush2.msra.mxu0 0.0
    %124 = vmatprep.subr.mxu0 0.0
    %125 = vmatpush2.msra.mxu0 0.0
    %126 = vmatprep.subr.mxu0 0.0
    %127 = vmatpush2.msra.mxu0 0.0
    %128 = vmatprep.subr.mxu0 0.0
    %129 = vmatpush2.msra.mxu0 0.0
    %130 = vmatprep.subr.mxu0 0.0
    %131 = vmatpush2.msra.mxu0 0.0
    %132 = vmatprep.subr.mxu0 0.0
    %133 = vmatpush2.msra.mxu0 0.0
    %134 = vmatprep.subr.mxu0 0.0
    %135 = vmatpush2.msra.mxu0 0.0
    %136 = vmatprep.subr.mxu0 0.0
    %137 = vmatpush2.msra.mxu0 0.0
    %138 = vmatprep.subr.mxu0 0.0
    %139 = vmatpush2.msra.mxu0 0.0
    %140 = vmatprep.subr.mxu0 0.0
    %141 = vmatpush2.msra.mxu0 0.0
    %142 = vmatprep.subr.mxu0 0.0
    %143 = vmatpush2.msra.mxu0 0.0
    %144 = vmatprep.mubr.f32.mxu0 0.0
    %145 = vmatmul.mubr.f32.gmra.mxu0 %v63
    %v146 = vpop.f32.mrf.mxu0
    %v147 = vadd.f32 %v59, %v146
    %v148 = vpop.f32.mrf.mxu0
    %149 = vmatprep.mubr.f32.mxu0 0.0
    %150 = vmatmul.mubr.f32.gmra.mxu0 %v66
    %v151 = vpop.f32.mrf.mxu0
    %v152 = vadd.f32 %v59, %v151
    %v153 = vpop.f32.mrf.mxu0
    %154 = vmatprep.mubr.f32.mxu0 0.0
    %155 = vmatmul.mubr.f32.gmra.mxu0 %v69
    %v156 = vpop.f32.mrf.mxu0
    %v157 = vadd.f32 %v59, %v156
    %v158 = vpop.f32.mrf.mxu0
    %159 = vmatprep.mubr.f32.mxu0 0.0
    %160 = vmatmul.mubr.f32.gmra.mxu0 %v72
    %v161 = vpop.f32.mrf.mxu0
    %v162 = vadd.f32 %v59, %v161
    %v163 = vpop.f32.mrf.mxu0
    %164 = vmatprep.mubr.f32.mxu0 0.0
    %165 = vmatmul.mubr.f32.gmra.mxu0 %v75
    %v166 = vpop.f32.mrf.mxu0
    %v167 = vadd.f32 %v59, %v166
    %v168 = vpop.f32.mrf.mxu0
    %169 = vmatprep.mubr.f32.mxu0 0.0
    %170 = vmatmul.mubr.f32.gmra.mxu0 %v78
    %v171 = vpop.f32.mrf.mxu0
    %v172 = vadd.f32 %v59, %v171
    %v173 = vpop.f32.mrf.mxu0
    %174 = vdwg.mxu0
    %v175 = vld [vmem:[%s3] sm:$0xff]
    %v176 = vld [vmem:[%s3 + $0x8] sm:$0xff]
    %179 = vrot.lane.b32.xlu0 %v157, 96
    %v180 = vpop.permute.xlu0 %179
    %181 = vrot.lane.b32.xlu0 %v162, 96
    %v182 = vpop.permute.xlu0 %181
    %vm183 = vcmask 64512
    %v185 = vsel %vm183, %v147, 0
    %v188 = vsel %vm183, %v152, 0
    %v190 = vsel %vm183, %v180, 0
    %v192 = vsel %vm183, %v182, 0
    %194 = vmatprep.subr.mxu0 0.0
    %195 = vmatpush1.xpose.msra.mxu0 0.0
    %196 = vmatprep.subr.mxu0 0.0
    %197 = vmatpush1.xpose.msra.mxu0 0.0
    %198 = vmatprep.subr.mxu0 0.0
    %199 = vmatpush1.xpose.msra.mxu0 0.0
    %200 = vmatprep.subr.mxu0 0.0
    %201 = vmatpush1.xpose.msra.mxu0 0.0
    %202 = vmatprep.subr.mxu0 0.0
    %203 = vmatpush1.xpose.msra.mxu0 0.0
    %204 = vmatprep.subr.mxu0 0.0
    %205 = vmatpush1.xpose.msra.mxu0 0.0
    %206 = vmatprep.subr.mxu0 0.0
    %207 = vmatpush1.xpose.msra.mxu0 0.0
    %208 = vmatprep.subr.mxu0 0.0
    %209 = vmatpush1.xpose.msra.mxu0 0.0
    %210 = vmatprep.subr.mxu0 0.0
    %211 = vmatpush1.xpose.msra.mxu0 0.0
    %212 = vmatprep.subr.mxu0 0.0
    %213 = vmatpush1.xpose.msra.mxu0 0.0
    %214 = vmatprep.subr.mxu0 0.0
    %215 = vmatpush1.xpose.msra.mxu0 0.0
    %216 = vmatprep.subr.mxu0 0.0
    %217 = vmatpush1.xpose.msra.mxu0 0.0
    %218 = vmatprep.subr.mxu0 0.0
    %219 = vmatpush1.xpose.msra.mxu0 0.0
    %220 = vmatprep.subr.mxu0 0.0
    %221 = vmatpush1.xpose.msra.mxu0 0.0
    %222 = vmatprep.subr.mxu0 0.0
    %223 = vmatpush1.xpose.msra.mxu0 %v192
    %224 = vmatprep.subr.mxu0 0.0
    %225 = vmatpush1.xpose.msra.mxu0 %v190
    %226 = vmatprep.subr.mxu0 0.0
    %227 = vmatpush2.xpose.msra.mxu0 0.0
    %228 = vmatprep.subr.mxu0 0.0
    %229 = vmatpush2.xpose.msra.mxu0 0.0
    %230 = vmatprep.subr.mxu0 0.0
    %231 = vmatpush2.xpose.msra.mxu0 0.0
    %232 = vmatprep.subr.mxu0 0.0
    %233 = vmatpush2.xpose.msra.mxu0 0.0
    %234 = vmatprep.subr.mxu0 0.0
    %235 = vmatpush2.xpose.msra.mxu0 0.0
    %236 = vmatprep.subr.mxu0 0.0
    %237 = vmatpush2.xpose.msra.mxu0 0.0
    %238 = vmatprep.subr.mxu0 0.0
    %239 = vmatpush2.xpose.msra.mxu0 0.0
    %240 = vmatprep.subr.mxu0 0.0
    %241 = vmatpush2.xpose.msra.mxu0 0.0
    %242 = vmatprep.subr.mxu0 0.0
    %243 = vmatpush2.xpose.msra.mxu0 0.0
    %244 = vmatprep.subr.mxu0 0.0
    %245 = vmatpush2.xpose.msra.mxu0 0.0
    %246 = vmatprep.subr.mxu0 0.0
    %247 = vmatpush2.xpose.msra.mxu0 0.0
    %248 = vmatprep.subr.mxu0 0.0
    %249 = vmatpush2.xpose.msra.mxu0 0.0
    %250 = vmatprep.subr.mxu0 0.0
    %251 = vmatpush2.xpose.msra.mxu0 0.0
    %252 = vmatprep.subr.mxu0 0.0
    %253 = vmatpush2.xpose.msra.mxu0 0.0
    %254 = vmatprep.subr.mxu0 0.0
    %255 = vmatpush2.xpose.msra.mxu0 0.0
    %256 = vmatprep.subr.mxu0 0.0
    %257 = vmatpush2.xpose.msra.mxu0 0.0
    %258 = vmatprep.mubr.f32.mxu0 0.0
    %259 = vmatmul.mubr.f32.gmra.mxu0 %v185
    %v260 = vpop.f32.mrf.mxu0
    %v261 = vadd.f32 %v175, %v260
    %v262 = vpop.f32.mrf.mxu0
    %263 = vmatprep.mubr.f32.mxu0 0.0
    %264 = vmatmul.mubr.f32.gmra.mxu0 %v188
    %v265 = vpop.f32.mrf.mxu0
    %v266 = vadd.f32 %v176, %v265
    %v267 = vpop.f32.mrf.mxu0
    %268 = vdwg.mxu0
    %vm269 = vcmask 130048
    %v270 = vsel %vm269, %v261, -inf
    %271 = vmax.xlane.f32.xlu0 %v270
    %v272 = vpop.xlane.xlu0 %271
    %v273 = vsel %vm269, %v266, -inf
    %274 = vmax.xlane.f32.xlu0 %v273
    %v275 = vpop.xlane.xlu0 %274
    %v276 = vsub.f32 %v261, %v272
    %v277 = vsub.f32 %v266, %v275
    %v278 = vmul.f32 %v276, 1.442695
    %v279 = vpow.pop %v278
    %v280 = vmul.f32 %v277, 1.442695
    %v281 = vpow.pop %v280
    %v282 = vsel %vm269, %v279, 0.0
    %283 = vadd.xlane.f32.xlu0 %v282
    %v284 = vpop.xlane.xlu0 %283
    %v285 = vsel %vm269, %v281, 0.0
    %286 = vadd.xlane.f32.xlu0 %v285
    %v287 = vpop.xlane.xlu0 %286
    %v288 = vrcp.pop %v284
    %v289 = vrcp.pop %v287
    %v290 = vmul.f32 %v279, %v288
    %v291 = vmul.f32 %v281, %v289
    %294 = vrot.lane.b32.xlu0 %v167, 64
    %v295 = vpop.permute.xlu0 %294
    %296 = vrot.lane.b32.xlu0 %v172, 64
    %v297 = vpop.permute.xlu0 %296
    %v301 = vsel %vm269, %v290, 0
    %v304 = vsel %vm269, %v291, 0
    %306 = vmatprep.subr.mxu0 0.0
    %307 = vmatpush1.msra.mxu0 0.0
    %308 = vmatprep.subr.mxu0 0.0
    %309 = vmatpush1.msra.mxu0 0.0
    %310 = vmatprep.subr.mxu0 0.0
    %311 = vmatpush1.msra.mxu0 0.0
    %312 = vmatprep.subr.mxu0 0.0
    %313 = vmatpush1.msra.mxu0 0.0
    %314 = vmatprep.subr.mxu0 0.0
    %315 = vmatpush1.msra.mxu0 0.0
    %316 = vmatprep.subr.mxu0 0.0
    %317 = vmatpush1.msra.mxu0 0.0
    %318 = vmatprep.subr.mxu0 0.0
    %319 = vmatpush1.msra.mxu0 0.0
    %320 = vmatprep.subr.mxu0 0.0
    %321 = vmatpush1.msra.mxu0 0.0
    %322 = vmatprep.subr.mxu0 0.0
    %323 = vmatpush1.msra.mxu0 0.0
    %324 = vmatprep.subr.mxu0 0.0
    %325 = vmatpush1.msra.mxu0 0.0
    %326 = vmatprep.subr.mxu0 0.0
    %327 = vmatpush1.msra.mxu0 0.0
    %328 = vmatprep.subr.mxu0 0.0
    %329 = vmatpush1.msra.mxu0 0.0
    %330 = vmatprep.subr.mxu0 0.0
    %331 = vmatpush1.msra.mxu0 0.0
    %332 = vmatprep.subr.mxu0 0.0
    %333 = vmatpush1.msra.mxu0 0.0
    %334 = vmatprep.subr.mxu0 0.0
    %335 = vmatpush1.msra.mxu0 %v297
    %336 = vmatprep.subr.mxu0 0.0
    %337 = vmatpush1.msra.mxu0 %v295
    %338 = vmatprep.subr.mxu0 0.0
    %339 = vmatpush2.msra.mxu0 0.0
    %340 = vmatprep.subr.mxu0 0.0
    %341 = vmatpush2.msra.mxu0 0.0
    %342 = vmatprep.subr.mxu0 0.0
    %343 = vmatpush2.msra.mxu0 0.0
    %344 = vmatprep.subr.mxu0 0.0
    %345 = vmatpush2.msra.mxu0 0.0
    %346 = vmatprep.subr.mxu0 0.0
    %347 = vmatpush2.msra.mxu0 0.0
    %348 = vmatprep.subr.mxu0 0.0
    %349 = vmatpush2.msra.mxu0 0.0
    %350 = vmatprep.subr.mxu0 0.0
    %351 = vmatpush2.msra.mxu0 0.0
    %352 = vmatprep.subr.mxu0 0.0
    %353 = vmatpush2.msra.mxu0 0.0
    %354 = vmatprep.subr.mxu0 0.0
    %355 = vmatpush2.msra.mxu0 0.0
    %356 = vmatprep.subr.mxu0 0.0
    %357 = vmatpush2.msra.mxu0 0.0
    %358 = vmatprep.subr.mxu0 0.0
    %359 = vmatpush2.msra.mxu0 0.0
    %360 = vmatprep.subr.mxu0 0.0
    %361 = vmatpush2.msra.mxu0 0.0
    %362 = vmatprep.subr.mxu0 0.0
    %363 = vmatpush2.msra.mxu0 0.0
    %364 = vmatprep.subr.mxu0 0.0
    %365 = vmatpush2.msra.mxu0 0.0
    %366 = vmatprep.subr.mxu0 0.0
    %367 = vmatpush2.msra.mxu0 0.0
    %368 = vmatprep.subr.mxu0 0.0
    %369 = vmatpush2.msra.mxu0 0.0
    %370 = vmatprep.mubr.f32.mxu0 0.0
    %371 = vmatmul.mubr.f32.gmra.mxu0 %v301
    %v372 = vpop.f32.mrf.mxu0
    %v373 = vadd.f32 0.0, %v372
    %v374 = vpop.f32.mrf.mxu0
    %375 = vmatprep.mubr.f32.mxu0 0.0
    %376 = vmatmul.mubr.f32.gmra.mxu0 %v304
    %v377 = vpop.f32.mrf.mxu0
    %v378 = vadd.f32 0.0, %v377
    %v379 = vpop.f32.mrf.mxu0
    %380 = vdwg.mxu0
    %381 = vrot.lane.b32.xlu0 %v147, 120
    %v382 = vpop.permute.xlu0 %381
    %383 = vrot.lane.b32.xlu0 %v152, 120
    %v384 = vpop.permute.xlu0 %383
    %385 = vrot.lane.b32.xlu0 %v157, 88
    %v386 = vpop.permute.xlu0 %385
    %387 = vrot.lane.b32.xlu0 %v162, 88
    %v388 = vpop.permute.xlu0 %387
    %v389 = vsel %vm183, %v382, 0
    %v391 = vsel %vm183, %v384, 0
    %v393 = vsel %vm183, %v386, 0
    %v395 = vsel %vm183, %v388, 0
    %397 = vmatprep.subr.mxu0 0.0
    %398 = vmatpush1.xpose.msra.mxu0 0.0
    %399 = vmatprep.subr.mxu0 0.0
    %400 = vmatpush1.xpose.msra.mxu0 0.0
    %401 = vmatprep.subr.mxu0 0.0
    %402 = vmatpush1.xpose.msra.mxu0 0.0
    %403 = vmatprep.subr.mxu0 0.0
    %404 = vmatpush1.xpose.msra.mxu0 0.0
    %405 = vmatprep.subr.mxu0 0.0
    %406 = vmatpush1.xpose.msra.mxu0 0.0
    %407 = vmatprep.subr.mxu0 0.0
    %408 = vmatpush1.xpose.msra.mxu0 0.0
    %409 = vmatprep.subr.mxu0 0.0
    %410 = vmatpush1.xpose.msra.mxu0 0.0
    %411 = vmatprep.subr.mxu0 0.0
    %412 = vmatpush1.xpose.msra.mxu0 0.0
    %413 = vmatprep.subr.mxu0 0.0
    %414 = vmatpush1.xpose.msra.mxu0 0.0
    %415 = vmatprep.subr.mxu0 0.0
    %416 = vmatpush1.xpose.msra.mxu0 0.0
    %417 = vmatprep.subr.mxu0 0.0
    %418 = vmatpush1.xpose.msra.mxu0 0.0
    %419 = vmatprep.subr.mxu0 0.0
    %420 = vmatpush1.xpose.msra.mxu0 0.0
    %421 = vmatprep.subr.mxu0 0.0
    %422 = vmatpush1.xpose.msra.mxu0 0.0
    %423 = vmatprep.subr.mxu0 0.0
    %424 = vmatpush1.xpose.msra.mxu0 0.0
    %425 = vmatprep.subr.mxu0 0.0
    %426 = vmatpush1.xpose.msra.mxu0 %v395
    %427 = vmatprep.subr.mxu0 0.0
    %428 = vmatpush1.xpose.msra.mxu0 %v393
    %429 = vmatprep.subr.mxu0 0.0
    %430 = vmatpush2.xpose.msra.mxu0 0.0
    %431 = vmatprep.subr.mxu0 0.0
    %432 = vmatpush2.xpose.msra.mxu0 0.0
    %433 = vmatprep.subr.mxu0 0.0
    %434 = vmatpush2.xpose.msra.mxu0 0.0
    %435 = vmatprep.subr.mxu0 0.0
    %436 = vmatpush2.xpose.msra.mxu0 0.0
    %437 = vmatprep.subr.mxu0 0.0
    %438 = vmatpush2.xpose.msra.mxu0 0.0
    %439 = vmatprep.subr.mxu0 0.0
    %440 = vmatpush2.xpose.msra.mxu0 0.0
    %441 = vmatprep.subr.mxu0 0.0
    %442 = vmatpush2.xpose.msra.mxu0 0.0
    %443 = vmatprep.subr.mxu0 0.0
    %444 = vmatpush2.xpose.msra.mxu0 0.0
    %445 = vmatprep.subr.mxu0 0.0
    %446 = vmatpush2.xpose.msra.mxu0 0.0
    %447 = vmatprep.subr.mxu0 0.0
    %448 = vmatpush2.xpose.msra.mxu0 0.0
    %449 = vmatprep.subr.mxu0 0.0
    %450 = vmatpush2.xpose.msra.mxu0 0.0
    %451 = vmatprep.subr.mxu0 0.0
    %452 = vmatpush2.xpose.msra.mxu0 0.0
    %453 = vmatprep.subr.mxu0 0.0
    %454 = vmatpush2.xpose.msra.mxu0 0.0
    %455 = vmatprep.subr.mxu0 0.0
    %456 = vmatpush2.xpose.msra.mxu0 0.0
    %457 = vmatprep.subr.mxu0 0.0
    %458 = vmatpush2.xpose.msra.mxu0 0.0
    %459 = vmatprep.subr.mxu0 0.0
    %460 = vmatpush2.xpose.msra.mxu0 0.0
    %461 = vmatprep.mubr.f32.mxu0 0.0
    %462 = vmatmul.mubr.f32.gmra.mxu0 %v389
    %v463 = vpop.f32.mrf.mxu0
    %v464 = vadd.f32 %v175, %v463
    %v465 = vpop.f32.mrf.mxu0
    %466 = vmatprep.mubr.f32.mxu0 0.0
    %467 = vmatmul.mubr.f32.gmra.mxu0 %v391
    %v468 = vpop.f32.mrf.mxu0
    %v469 = vadd.f32 %v176, %v468
    %v470 = vpop.f32.mrf.mxu0
    %471 = vdwg.mxu0
    %v472 = vsel %vm269, %v464, -inf
    %473 = vmax.xlane.f32.xlu0 %v472
    %v474 = vpop.xlane.xlu0 %473
    %v475 = vsel %vm269, %v469, -inf
    %476 = vmax.xlane.f32.xlu0 %v475
    %v477 = vpop.xlane.xlu0 %476
    %v478 = vsub.f32 %v464, %v474
    %v479 = vsub.f32 %v469, %v477
    %v480 = vmul.f32 %v478, 1.442695
    %v481 = vpow.pop %v480
    %v482 = vmul.f32 %v479, 1.442695
    %v483 = vpow.pop %v482
    %v484 = vsel %vm269, %v481, 0.0
    %485 = vadd.xlane.f32.xlu0 %v484
    %v486 = vpop.xlane.xlu0 %485
    %v487 = vsel %vm269, %v483, 0.0
    %488 = vadd.xlane.f32.xlu0 %v487
    %v489 = vpop.xlane.xlu0 %488
    %v490 = vrcp.pop %v486
    %v491 = vrcp.pop %v489
    %v492 = vmul.f32 %v481, %v490
    %v493 = vmul.f32 %v483, %v491
    %494 = vrot.lane.b32.xlu0 %v167, 56
    %v495 = vpop.permute.xlu0 %494
    %496 = vrot.lane.b32.xlu0 %v172, 56
    %v497 = vpop.permute.xlu0 %496
    %v501 = vsel %vm269, %v492, 0
    %v504 = vsel %vm269, %v493, 0
    %506 = vmatprep.subr.mxu0 0.0
    %507 = vmatpush1.msra.mxu0 0.0
    %508 = vmatprep.subr.mxu0 0.0
    %509 = vmatpush1.msra.mxu0 0.0
    %510 = vmatprep.subr.mxu0 0.0
    %511 = vmatpush1.msra.mxu0 0.0
    %512 = vmatprep.subr.mxu0 0.0
    %513 = vmatpush1.msra.mxu0 0.0
    %514 = vmatprep.subr.mxu0 0.0
    %515 = vmatpush1.msra.mxu0 0.0
    %516 = vmatprep.subr.mxu0 0.0
    %517 = vmatpush1.msra.mxu0 0.0
    %518 = vmatprep.subr.mxu0 0.0
    %519 = vmatpush1.msra.mxu0 0.0
    %520 = vmatprep.subr.mxu0 0.0
    %521 = vmatpush1.msra.mxu0 0.0
    %522 = vmatprep.subr.mxu0 0.0
    %523 = vmatpush1.msra.mxu0 0.0
    %524 = vmatprep.subr.mxu0 0.0
    %525 = vmatpush1.msra.mxu0 0.0
    %526 = vmatprep.subr.mxu0 0.0
    %527 = vmatpush1.msra.mxu0 0.0
    %528 = vmatprep.subr.mxu0 0.0
    %529 = vmatpush1.msra.mxu0 0.0
    %530 = vmatprep.subr.mxu0 0.0
    %531 = vmatpush1.msra.mxu0 0.0
    %532 = vmatprep.subr.mxu0 0.0
    %533 = vmatpush1.msra.mxu0 0.0
    %534 = vmatprep.subr.mxu0 0.0
    %535 = vmatpush1.msra.mxu0 %v497
    %536 = vmatprep.subr.mxu0 0.0
    %537 = vmatpush1.msra.mxu0 %v495
    %538 = vmatprep.subr.mxu0 0.0
    %539 = vmatpush2.msra.mxu0 0.0
    %540 = vmatprep.subr.mxu0 0.0
    %541 = vmatpush2.msra.mxu0 0.0
    %542 = vmatprep.subr.mxu0 0.0
    %543 = vmatpush2.msra.mxu0 0.0
    %544 = vmatprep.subr.mxu0 0.0
    %545 = vmatpush2.msra.mxu0 0.0
    %546 = vmatprep.subr.mxu0 0.0
    %547 = vmatpush2.msra.mxu0 0.0
    %548 = vmatprep.subr.mxu0 0.0
    %549 = vmatpush2.msra.mxu0 0.0
    %550 = vmatprep.subr.mxu0 0.0
    %551 = vmatpush2.msra.mxu0 0.0
    %552 = vmatprep.subr.mxu0 0.0
    %553 = vmatpush2.msra.mxu0 0.0
    %554 = vmatprep.subr.mxu0 0.0
    %555 = vmatpush2.msra.mxu0 0.0
    %556 = vmatprep.subr.mxu0 0.0
    %557 = vmatpush2.msra.mxu0 0.0
    %558 = vmatprep.subr.mxu0 0.0
    %559 = vmatpush2.msra.mxu0 0.0
    %560 = vmatprep.subr.mxu0 0.0
    %561 = vmatpush2.msra.mxu0 0.0
    %562 = vmatprep.subr.mxu0 0.0
    %563 = vmatpush2.msra.mxu0 0.0
    %564 = vmatprep.subr.mxu0 0.0
    %565 = vmatpush2.msra.mxu0 0.0
    %566 = vmatprep.subr.mxu0 0.0
    %567 = vmatpush2.msra.mxu0 0.0
    %568 = vmatprep.subr.mxu0 0.0
    %569 = vmatpush2.msra.mxu0 0.0
    %570 = vmatprep.mubr.f32.mxu0 0.0
    %571 = vmatmul.mubr.f32.gmra.mxu0 %v501
    %v572 = vpop.f32.mrf.mxu0
    %v573 = vadd.f32 0.0, %v572
    %v574 = vpop.f32.mrf.mxu0
    %575 = vmatprep.mubr.f32.mxu0 0.0
    %576 = vmatmul.mubr.f32.gmra.mxu0 %v504
    %v577 = vpop.f32.mrf.mxu0
    %v578 = vadd.f32 0.0, %v577
    %v579 = vpop.f32.mrf.mxu0
    %580 = vdwg.mxu0
    %581 = vrot.lane.b32.xlu0 %v147, 112
    %v582 = vpop.permute.xlu0 %581
    %583 = vrot.lane.b32.xlu0 %v152, 112
    %v584 = vpop.permute.xlu0 %583
    %585 = vrot.lane.b32.xlu0 %v157, 80
    %v586 = vpop.permute.xlu0 %585
    %587 = vrot.lane.b32.xlu0 %v162, 80
    %v588 = vpop.permute.xlu0 %587
    %v589 = vsel %vm183, %v582, 0
    %v591 = vsel %vm183, %v584, 0
    %v593 = vsel %vm183, %v586, 0
    %v595 = vsel %vm183, %v588, 0
    %597 = vmatprep.subr.mxu0 0.0
    %598 = vmatpush1.xpose.msra.mxu0 0.0
    %599 = vmatprep.subr.mxu0 0.0
    %600 = vmatpush1.xpose.msra.mxu0 0.0
    %601 = vmatprep.subr.mxu0 0.0
    %602 = vmatpush1.xpose.msra.mxu0 0.0
    %603 = vmatprep.subr.mxu0 0.0
    %604 = vmatpush1.xpose.msra.mxu0 0.0
    %605 = vmatprep.subr.mxu0 0.0
    %606 = vmatpush1.xpose.msra.mxu0 0.0
    %607 = vmatprep.subr.mxu0 0.0
    %608 = vmatpush1.xpose.msra.mxu0 0.0
    %609 = vmatprep.subr.mxu0 0.0
    %610 = vmatpush1.xpose.msra.mxu0 0.0
    %611 = vmatprep.subr.mxu0 0.0
    %612 = vmatpush1.xpose.msra.mxu0 0.0
    %613 = vmatprep.subr.mxu0 0.0
    %614 = vmatpush1.xpose.msra.mxu0 0.0
    %615 = vmatprep.subr.mxu0 0.0
    %616 = vmatpush1.xpose.msra.mxu0 0.0
    %617 = vmatprep.subr.mxu0 0.0
    %618 = vmatpush1.xpose.msra.mxu0 0.0
    %619 = vmatprep.subr.mxu0 0.0
    %620 = vmatpush1.xpose.msra.mxu0 0.0
    %621 = vmatprep.subr.mxu0 0.0
    %622 = vmatpush1.xpose.msra.mxu0 0.0
    %623 = vmatprep.subr.mxu0 0.0
    %624 = vmatpush1.xpose.msra.mxu0 0.0
    %625 = vmatprep.subr.mxu0 0.0
    %626 = vmatpush1.xpose.msra.mxu0 %v595
    %627 = vmatprep.subr.mxu0 0.0
    %628 = vmatpush1.xpose.msra.mxu0 %v593
    %629 = vmatprep.subr.mxu0 0.0
    %630 = vmatpush2.xpose.msra.mxu0 0.0
    %631 = vmatprep.subr.mxu0 0.0
    %632 = vmatpush2.xpose.msra.mxu0 0.0
    %633 = vmatprep.subr.mxu0 0.0
    %634 = vmatpush2.xpose.msra.mxu0 0.0
    %635 = vmatprep.subr.mxu0 0.0
    %636 = vmatpush2.xpose.msra.mxu0 0.0
    %637 = vmatprep.subr.mxu0 0.0
    %638 = vmatpush2.xpose.msra.mxu0 0.0
    %639 = vmatprep.subr.mxu0 0.0
    %640 = vmatpush2.xpose.msra.mxu0 0.0
    %641 = vmatprep.subr.mxu0 0.0
    %642 = vmatpush2.xpose.msra.mxu0 0.0
    %643 = vmatprep.subr.mxu0 0.0
    %644 = vmatpush2.xpose.msra.mxu0 0.0
    %645 = vmatprep.subr.mxu0 0.0
    %646 = vmatpush2.xpose.msra.mxu0 0.0
    %647 = vmatprep.subr.mxu0 0.0
    %648 = vmatpush2.xpose.msra.mxu0 0.0
    %649 = vmatprep.subr.mxu0 0.0
    %650 = vmatpush2.xpose.msra.mxu0 0.0
    %651 = vmatprep.subr.mxu0 0.0
    %652 = vmatpush2.xpose.msra.mxu0 0.0
    %653 = vmatprep.subr.mxu0 0.0
    %654 = vmatpush2.xpose.msra.mxu0 0.0
    %655 = vmatprep.subr.mxu0 0.0
    %656 = vmatpush2.xpose.msra.mxu0 0.0
    %657 = vmatprep.subr.mxu0 0.0
    %658 = vmatpush2.xpose.msra.mxu0 0.0
    %659 = vmatprep.subr.mxu0 0.0
    %660 = vmatpush2.xpose.msra.mxu0 0.0
    %661 = vmatprep.mubr.f32.mxu0 0.0
    %662 = vmatmul.mubr.f32.gmra.mxu0 %v589
    %v663 = vpop.f32.mrf.mxu0
    %v664 = vadd.f32 %v175, %v663
    %v665 = vpop.f32.mrf.mxu0
    %666 = vmatprep.mubr.f32.mxu0 0.0
    %667 = vmatmul.mubr.f32.gmra.mxu0 %v591
    %v668 = vpop.f32.mrf.mxu0
    %v669 = vadd.f32 %v176, %v668
    %v670 = vpop.f32.mrf.mxu0
    %671 = vdwg.mxu0
    %v672 = vsel %vm269, %v664, -inf
    %673 = vmax.xlane.f32.xlu0 %v672
    %v674 = vpop.xlane.xlu0 %673
    %v675 = vsel %vm269, %v669, -inf
    %676 = vmax.xlane.f32.xlu0 %v675
    %v677 = vpop.xlane.xlu0 %676
    %v678 = vsub.f32 %v664, %v674
    %v679 = vsub.f32 %v669, %v677
    %v680 = vmul.f32 %v678, 1.442695
    %v681 = vpow.pop %v680
    %v682 = vmul.f32 %v679, 1.442695
    %v683 = vpow.pop %v682
    %v684 = vsel %vm269, %v681, 0.0
    %685 = vadd.xlane.f32.xlu0 %v684
    %v686 = vpop.xlane.xlu0 %685
    %v687 = vsel %vm269, %v683, 0.0
    %688 = vadd.xlane.f32.xlu0 %v687
    %v689 = vpop.xlane.xlu0 %688
    %v690 = vrcp.pop %v686
    %v691 = vrcp.pop %v689
    %v692 = vmul.f32 %v681, %v690
    %v693 = vmul.f32 %v683, %v691
    %694 = vrot.lane.b32.xlu0 %v167, 48
    %v695 = vpop.permute.xlu0 %694
    %696 = vrot.lane.b32.xlu0 %v172, 48
    %v697 = vpop.permute.xlu0 %696
    %v701 = vsel %vm269, %v692, 0
    %v704 = vsel %vm269, %v693, 0
    %706 = vmatprep.subr.mxu0 0.0
    %707 = vmatpush1.msra.mxu0 0.0
    %708 = vmatprep.subr.mxu0 0.0
    %709 = vmatpush1.msra.mxu0 0.0
    %710 = vmatprep.subr.mxu0 0.0
    %711 = vmatpush1.msra.mxu0 0.0
    %712 = vmatprep.subr.mxu0 0.0
    %713 = vmatpush1.msra.mxu0 0.0
    %714 = vmatprep.subr.mxu0 0.0
    %715 = vmatpush1.msra.mxu0 0.0
    %716 = vmatprep.subr.mxu0 0.0
    %717 = vmatpush1.msra.mxu0 0.0
    %718 = vmatprep.subr.mxu0 0.0
    %719 = vmatpush1.msra.mxu0 0.0
    %720 = vmatprep.subr.mxu0 0.0
    %721 = vmatpush1.msra.mxu0 0.0
    %722 = vmatprep.subr.mxu0 0.0
    %723 = vmatpush1.msra.mxu0 0.0
    %724 = vmatprep.subr.mxu0 0.0
    %725 = vmatpush1.msra.mxu0 0.0
    %726 = vmatprep.subr.mxu0 0.0
    %727 = vmatpush1.msra.mxu0 0.0
    %728 = vmatprep.subr.mxu0 0.0
    %729 = vmatpush1.msra.mxu0 0.0
    %730 = vmatprep.subr.mxu0 0.0
    %731 = vmatpush1.msra.mxu0 0.0
    %732 = vmatprep.subr.mxu0 0.0
    %733 = vmatpush1.msra.mxu0 0.0
    %734 = vmatprep.subr.mxu0 0.0
    %735 = vmatpush1.msra.mxu0 %v697
    %736 = vmatprep.subr.mxu0 0.0
    %737 = vmatpush1.msra.mxu0 %v695
    %738 = vmatprep.subr.mxu0 0.0
    %739 = vmatpush2.msra.mxu0 0.0
    %740 = vmatprep.subr.mxu0 0.0
    %741 = vmatpush2.msra.mxu0 0.0
    %742 = vmatprep.subr.mxu0 0.0
    %743 = vmatpush2.msra.mxu0 0.0
    %744 = vmatprep.subr.mxu0 0.0
    %745 = vmatpush2.msra.mxu0 0.0
    %746 = vmatprep.subr.mxu0 0.0
    %747 = vmatpush2.msra.mxu0 0.0
    %748 = vmatprep.subr.mxu0 0.0
    %749 = vmatpush2.msra.mxu0 0.0
    %750 = vmatprep.subr.mxu0 0.0
    %751 = vmatpush2.msra.mxu0 0.0
    %752 = vmatprep.subr.mxu0 0.0
    %753 = vmatpush2.msra.mxu0 0.0
    %754 = vmatprep.subr.mxu0 0.0
    %755 = vmatpush2.msra.mxu0 0.0
    %756 = vmatprep.subr.mxu0 0.0
    %757 = vmatpush2.msra.mxu0 0.0
    %758 = vmatprep.subr.mxu0 0.0
    %759 = vmatpush2.msra.mxu0 0.0
    %760 = vmatprep.subr.mxu0 0.0
    %761 = vmatpush2.msra.mxu0 0.0
    %762 = vmatprep.subr.mxu0 0.0
    %763 = vmatpush2.msra.mxu0 0.0
    %764 = vmatprep.subr.mxu0 0.0
    %765 = vmatpush2.msra.mxu0 0.0
    %766 = vmatprep.subr.mxu0 0.0
    %767 = vmatpush2.msra.mxu0 0.0
    %768 = vmatprep.subr.mxu0 0.0
    %769 = vmatpush2.msra.mxu0 0.0
    %770 = vmatprep.mubr.f32.mxu0 0.0
    %771 = vmatmul.mubr.f32.gmra.mxu0 %v701
    %v772 = vpop.f32.mrf.mxu0
    %v773 = vadd.f32 0.0, %v772
    %v774 = vpop.f32.mrf.mxu0
    %775 = vmatprep.mubr.f32.mxu0 0.0
    %776 = vmatmul.mubr.f32.gmra.mxu0 %v704
    %v777 = vpop.f32.mrf.mxu0
    %v778 = vadd.f32 0.0, %v777
    %v779 = vpop.f32.mrf.mxu0
    %780 = vdwg.mxu0
    %781 = vrot.lane.b32.xlu0 %v147, 104
    %v782 = vpop.permute.xlu0 %781
    %783 = vrot.lane.b32.xlu0 %v152, 104
    %v784 = vpop.permute.xlu0 %783
    %785 = vrot.lane.b32.xlu0 %v157, 72
    %v786 = vpop.permute.xlu0 %785
    %787 = vrot.lane.b32.xlu0 %v162, 72
    %v788 = vpop.permute.xlu0 %787
    %v789 = vsel %vm183, %v782, 0
    %v791 = vsel %vm183, %v784, 0
    %v793 = vsel %vm183, %v786, 0
    %v795 = vsel %vm183, %v788, 0
    %797 = vmatprep.subr.mxu0 0.0
    %798 = vmatpush1.xpose.msra.mxu0 0.0
    %799 = vmatprep.subr.mxu0 0.0
    %800 = vmatpush1.xpose.msra.mxu0 0.0
    %801 = vmatprep.subr.mxu0 0.0
    %802 = vmatpush1.xpose.msra.mxu0 0.0
    %803 = vmatprep.subr.mxu0 0.0
    %804 = vmatpush1.xpose.msra.mxu0 0.0
    %805 = vmatprep.subr.mxu0 0.0
    %806 = vmatpush1.xpose.msra.mxu0 0.0
    %807 = vmatprep.subr.mxu0 0.0
    %808 = vmatpush1.xpose.msra.mxu0 0.0
    %809 = vmatprep.subr.mxu0 0.0
    %810 = vmatpush1.xpose.msra.mxu0 0.0
    %811 = vmatprep.subr.mxu0 0.0
    %812 = vmatpush1.xpose.msra.mxu0 0.0
    %813 = vmatprep.subr.mxu0 0.0
    %814 = vmatpush1.xpose.msra.mxu0 0.0
    %815 = vmatprep.subr.mxu0 0.0
    %816 = vmatpush1.xpose.msra.mxu0 0.0
    %817 = vmatprep.subr.mxu0 0.0
    %818 = vmatpush1.xpose.msra.mxu0 0.0
    %819 = vmatprep.subr.mxu0 0.0
    %820 = vmatpush1.xpose.msra.mxu0 0.0
    %821 = vmatprep.subr.mxu0 0.0
    %822 = vmatpush1.xpose.msra.mxu0 0.0
    %823 = vmatprep.subr.mxu0 0.0
    %824 = vmatpush1.xpose.msra.mxu0 0.0
    %825 = vmatprep.subr.mxu0 0.0
    %826 = vmatpush1.xpose.msra.mxu0 %v795
    %827 = vmatprep.subr.mxu0 0.0
    %828 = vmatpush1.xpose.msra.mxu0 %v793
    %829 = vmatprep.subr.mxu0 0.0
    %830 = vmatpush2.xpose.msra.mxu0 0.0
    %831 = vmatprep.subr.mxu0 0.0
    %832 = vmatpush2.xpose.msra.mxu0 0.0
    %833 = vmatprep.subr.mxu0 0.0
    %834 = vmatpush2.xpose.msra.mxu0 0.0
    %835 = vmatprep.subr.mxu0 0.0
    %836 = vmatpush2.xpose.msra.mxu0 0.0
    %837 = vmatprep.subr.mxu0 0.0
    %838 = vmatpush2.xpose.msra.mxu0 0.0
    %839 = vmatprep.subr.mxu0 0.0
    %840 = vmatpush2.xpose.msra.mxu0 0.0
    %841 = vmatprep.subr.mxu0 0.0
    %842 = vmatpush2.xpose.msra.mxu0 0.0
    %843 = vmatprep.subr.mxu0 0.0
    %844 = vmatpush2.xpose.msra.mxu0 0.0
    %845 = vmatprep.subr.mxu0 0.0
    %846 = vmatpush2.xpose.msra.mxu0 0.0
    %847 = vmatprep.subr.mxu0 0.0
    %848 = vmatpush2.xpose.msra.mxu0 0.0
    %849 = vmatprep.subr.mxu0 0.0
    %850 = vmatpush2.xpose.msra.mxu0 0.0
    %851 = vmatprep.subr.mxu0 0.0
    %852 = vmatpush2.xpose.msra.mxu0 0.0
    %853 = vmatprep.subr.mxu0 0.0
    %854 = vmatpush2.xpose.msra.mxu0 0.0
    %855 = vmatprep.subr.mxu0 0.0
    %856 = vmatpush2.xpose.msra.mxu0 0.0
    %857 = vmatprep.subr.mxu0 0.0
    %858 = vmatpush2.xpose.msra.mxu0 0.0
    %859 = vmatprep.subr.mxu0 0.0
    %860 = vmatpush2.xpose.msra.mxu0 0.0
    %861 = vmatprep.mubr.f32.mxu0 0.0
    %862 = vmatmul.mubr.f32.gmra.mxu0 %v789
    %v863 = vpop.f32.mrf.mxu0
    %v864 = vadd.f32 %v175, %v863
    %v865 = vpop.f32.mrf.mxu0
    %866 = vmatprep.mubr.f32.mxu0 0.0
    %867 = vmatmul.mubr.f32.gmra.mxu0 %v791
    %v868 = vpop.f32.mrf.mxu0
    %v869 = vadd.f32 %v176, %v868
    %v870 = vpop.f32.mrf.mxu0
    %871 = vdwg.mxu0
    %v872 = vsel %vm269, %v864, -inf
    %873 = vmax.xlane.f32.xlu0 %v872
    %v874 = vpop.xlane.xlu0 %873
    %v875 = vsel %vm269, %v869, -inf
    %876 = vmax.xlane.f32.xlu0 %v875
    %v877 = vpop.xlane.xlu0 %876
    %v878 = vsub.f32 %v864, %v874
    %v879 = vsub.f32 %v869, %v877
    %v880 = vmul.f32 %v878, 1.442695
    %v881 = vpow.pop %v880
    %v882 = vmul.f32 %v879, 1.442695
    %v883 = vpow.pop %v882
    %v884 = vsel %vm269, %v881, 0.0
    %885 = vadd.xlane.f32.xlu0 %v884
    %v886 = vpop.xlane.xlu0 %885
    %v887 = vsel %vm269, %v883, 0.0
    %888 = vadd.xlane.f32.xlu0 %v887
    %v889 = vpop.xlane.xlu0 %888
    %v890 = vrcp.pop %v886
    %v891 = vrcp.pop %v889
    %v892 = vmul.f32 %v881, %v890
    %v893 = vmul.f32 %v883, %v891
    %894 = vrot.lane.b32.xlu0 %v167, 40
    %v895 = vpop.permute.xlu0 %894
    %896 = vrot.lane.b32.xlu0 %v172, 40
    %v897 = vpop.permute.xlu0 %896
    %v901 = vsel %vm269, %v892, 0
    %v904 = vsel %vm269, %v893, 0
    %906 = vmatprep.subr.mxu0 0.0
    %907 = vmatpush1.msra.mxu0 0.0
    %908 = vmatprep.subr.mxu0 0.0
    %909 = vmatpush1.msra.mxu0 0.0
    %910 = vmatprep.subr.mxu0 0.0
    %911 = vmatpush1.msra.mxu0 0.0
    %912 = vmatprep.subr.mxu0 0.0
    %913 = vmatpush1.msra.mxu0 0.0
    %914 = vmatprep.subr.mxu0 0.0
    %915 = vmatpush1.msra.mxu0 0.0
    %916 = vmatprep.subr.mxu0 0.0
    %917 = vmatpush1.msra.mxu0 0.0
    %918 = vmatprep.subr.mxu0 0.0
    %919 = vmatpush1.msra.mxu0 0.0
    %920 = vmatprep.subr.mxu0 0.0
    %921 = vmatpush1.msra.mxu0 0.0
    %922 = vmatprep.subr.mxu0 0.0
    %923 = vmatpush1.msra.mxu0 0.0
    %924 = vmatprep.subr.mxu0 0.0
    %925 = vmatpush1.msra.mxu0 0.0
    %926 = vmatprep.subr.mxu0 0.0
    %927 = vmatpush1.msra.mxu0 0.0
    %928 = vmatprep.subr.mxu0 0.0
    %929 = vmatpush1.msra.mxu0 0.0
    %930 = vmatprep.subr.mxu0 0.0
    %931 = vmatpush1.msra.mxu0 0.0
    %932 = vmatprep.subr.mxu0 0.0
    %933 = vmatpush1.msra.mxu0 0.0
    %934 = vmatprep.subr.mxu0 0.0
    %935 = vmatpush1.msra.mxu0 %v897
    %936 = vmatprep.subr.mxu0 0.0
    %937 = vmatpush1.msra.mxu0 %v895
    %938 = vmatprep.subr.mxu0 0.0
    %939 = vmatpush2.msra.mxu0 0.0
    %940 = vmatprep.subr.mxu0 0.0
    %941 = vmatpush2.msra.mxu0 0.0
    %942 = vmatprep.subr.mxu0 0.0
    %943 = vmatpush2.msra.mxu0 0.0
    %944 = vmatprep.subr.mxu0 0.0
    %945 = vmatpush2.msra.mxu0 0.0
    %946 = vmatprep.subr.mxu0 0.0
    %947 = vmatpush2.msra.mxu0 0.0
    %948 = vmatprep.subr.mxu0 0.0
    %949 = vmatpush2.msra.mxu0 0.0
    %950 = vmatprep.subr.mxu0 0.0
    %951 = vmatpush2.msra.mxu0 0.0
    %952 = vmatprep.subr.mxu0 0.0
    %953 = vmatpush2.msra.mxu0 0.0
    %954 = vmatprep.subr.mxu0 0.0
    %955 = vmatpush2.msra.mxu0 0.0
    %956 = vmatprep.subr.mxu0 0.0
    %957 = vmatpush2.msra.mxu0 0.0
    %958 = vmatprep.subr.mxu0 0.0
    %959 = vmatpush2.msra.mxu0 0.0
    %960 = vmatprep.subr.mxu0 0.0
    %961 = vmatpush2.msra.mxu0 0.0
    %962 = vmatprep.subr.mxu0 0.0
    %963 = vmatpush2.msra.mxu0 0.0
    %964 = vmatprep.subr.mxu0 0.0
    %965 = vmatpush2.msra.mxu0 0.0
    %966 = vmatprep.subr.mxu0 0.0
    %967 = vmatpush2.msra.mxu0 0.0
    %968 = vmatprep.subr.mxu0 0.0
    %969 = vmatpush2.msra.mxu0 0.0
    %970 = vmatprep.mubr.f32.mxu0 0.0
    %971 = vmatmul.mubr.f32.gmra.mxu0 %v901
    %v972 = vpop.f32.mrf.mxu0
    %v973 = vadd.f32 0.0, %v972
    %v974 = vpop.f32.mrf.mxu0
    %975 = vmatprep.mubr.f32.mxu0 0.0
    %976 = vmatmul.mubr.f32.gmra.mxu0 %v904
    %v977 = vpop.f32.mrf.mxu0
    %v978 = vadd.f32 0.0, %v977
    %v979 = vpop.f32.mrf.mxu0
    %980 = vdwg.mxu0
    %983 = vrot.lane.b32.xlu0 %v573, 8
    %v984 = vpop.permute.xlu0 %983
    %985 = vrot.lane.b32.xlu0 %v578, 8
    %v986 = vpop.permute.xlu0 %985
    %991 = vrot.lane.b32.xlu0 %v773, 16
    %v992 = vpop.permute.xlu0 %991
    %993 = vrot.lane.b32.xlu0 %v778, 16
    %v994 = vpop.permute.xlu0 %993
    %999 = vrot.lane.b32.xlu0 %v973, 24
    %v1000 = vpop.permute.xlu0 %999
    %1001 = vrot.lane.b32.xlu0 %v978, 24
    %v1002 = vpop.permute.xlu0 %1001
    %v1005 = vsel %vm183, %v373, %v984
    %v1006 = vsel %vm183, %v378, %v986
    %v1007 = vsel %vm269, %v1005, %v992
    %v1008 = vsel %vm269, %v1006, %v994
    %vm1009 = vcmask 195584
    %v1010 = vsel %vm1009, %v1007, %v1000
    %v1011 = vsel %vm1009, %v1008, %v1002
    %v1012 = vld [vmem:[%s6] sm:$0xff]
    %v1013 = vld [vmem:[%s6 + $0x8] sm:$0xff]
    %v1014 = vld [vmem:[%s6 + $0x10] sm:$0xff]
    %v1015 = vld [vmem:[%s6 + $0x18] sm:$0xff]
    %v1016 = vld [vmem:[%s7] sm:$0x1]
    %v1018 = vlaneseq
    %v1019 = vshrl.u32 %v1018, 7
    %v1020 = vsub.s32 0, %v1019
    %v1021 = vrot.slane %v1016, %v1020
    %v1024 = vsel %vm61, %v1010, 0
    %v1027 = vsel %vm61, %v1011, 0
    %1029 = vmatprep.subr.mxu0 0.0
    %1030 = vmatpush1.msra.mxu0 0.0
    %1031 = vmatprep.subr.mxu0 0.0
    %1032 = vmatpush1.msra.mxu0 0.0
    %1033 = vmatprep.subr.mxu0 0.0
    %1034 = vmatpush1.msra.mxu0 0.0
    %1035 = vmatprep.subr.mxu0 0.0
    %1036 = vmatpush1.msra.mxu0 0.0
    %1037 = vmatprep.subr.mxu0 0.0
    %1038 = vmatpush1.msra.mxu0 0.0
    %1039 = vmatprep.subr.mxu0 0.0
    %1040 = vmatpush1.msra.mxu0 0.0
    %1041 = vmatprep.subr.mxu0 0.0
    %1042 = vmatpush1.msra.mxu0 0.0
    %1043 = vmatprep.subr.mxu0 0.0
    %1044 = vmatpush1.msra.mxu0 0.0
    %1045 = vmatprep.subr.mxu0 0.0
    %1046 = vmatpush1.msra.mxu0 0.0
    %1047 = vmatprep.subr.mxu0 0.0
    %1048 = vmatpush1.msra.mxu0 0.0
    %1049 = vmatprep.subr.mxu0 0.0
    %1050 = vmatpush1.msra.mxu0 0.0
    %1051 = vmatprep.subr.mxu0 0.0
    %1052 = vmatpush1.msra.mxu0 0.0
    %1053 = vmatprep.subr.mxu0 0.0
    %1054 = vmatpush1.msra.mxu0 %v1015
    %1055 = vmatprep.subr.mxu0 0.0
    %1056 = vmatpush1.msra.mxu0 %v1014
    %1057 = vmatprep.subr.mxu0 0.0
    %1058 = vmatpush1.msra.mxu0 %v1013
    %1059 = vmatprep.subr.mxu0 0.0
    %1060 = vmatpush1.msra.mxu0 %v1012
    %1061 = vmatprep.subr.mxu0 0.0
    %1062 = vmatpush2.msra.mxu0 0.0
    %1063 = vmatprep.subr.mxu0 0.0
    %1064 = vmatpush2.msra.mxu0 0.0
    %1065 = vmatprep.subr.mxu0 0.0
    %1066 = vmatpush2.msra.mxu0 0.0
    %1067 = vmatprep.subr.mxu0 0.0
    %1068 = vmatpush2.msra.mxu0 0.0
    %1069 = vmatprep.subr.mxu0 0.0
    %1070 = vmatpush2.msra.mxu0 0.0
    %1071 = vmatprep.subr.mxu0 0.0
    %1072 = vmatpush2.msra.mxu0 0.0
    %1073 = vmatprep.subr.mxu0 0.0
    %1074 = vmatpush2.msra.mxu0 0.0
    %1075 = vmatprep.subr.mxu0 0.0
    %1076 = vmatpush2.msra.mxu0 0.0
    %1077 = vmatprep.subr.mxu0 0.0
    %1078 = vmatpush2.msra.mxu0 0.0
    %1079 = vmatprep.subr.mxu0 0.0
    %1080 = vmatpush2.msra.mxu0 0.0
    %1081 = vmatprep.subr.mxu0 0.0
    %1082 = vmatpush2.msra.mxu0 0.0
    %1083 = vmatprep.subr.mxu0 0.0
    %1084 = vmatpush2.msra.mxu0 0.0
    %1085 = vmatprep.subr.mxu0 0.0
    %1086 = vmatpush2.msra.mxu0 0.0
    %1087 = vmatprep.subr.mxu0 0.0
    %1088 = vmatpush2.msra.mxu0 0.0
    %1089 = vmatprep.subr.mxu0 0.0
    %1090 = vmatpush2.msra.mxu0 0.0
    %1091 = vmatprep.subr.mxu0 0.0
    %1092 = vmatpush2.msra.mxu0 0.0
    %1093 = vmatprep.mubr.f32.mxu0 0.0
    %1094 = vmatmul.mubr.f32.gmra.mxu0 %v1024
    %v1095 = vpop.f32.mrf.mxu0
    %v1096 = vadd.f32 %v1021, %v1095
    %v1097 = vpop.f32.mrf.mxu0
    %1098 = vmatprep.mubr.f32.mxu0 0.0
    %1099 = vmatmul.mubr.f32.gmra.mxu0 %v1027
    %v1100 = vpop.f32.mrf.mxu0
    %v1101 = vadd.f32 %v1021, %v1100
    %v1102 = vpop.f32.mrf.mxu0
    %1103 = vdwg.mxu0
    %1104 = vst.msk [vmem:[#allocation5] sm:$0xff] %vm61, %v1096
    %1105 = vst.msk [vmem:[#allocation5 + $0x8] sm:$0xff] %vm61, %v1101
    // Predicated region
    $region38: #{_attn_jit.1} parent=1 // pred_check
      _
    $region39: #{_attn_jit.1} parent=1 // pred_check_branch
      %1107 = sbr.rel (0) target = $region41
    $region40: #{_attn_jit.1} parent=1 // pred_region
      %s1109 = ssub.s32 256, 256
      %1110 = vsyncadd [#allocation4], %s1109
      %s1111 = sshll.u32 [#allocation5], 4
      %s1112 = int_to_ptr.vmem [resolvable:$true] %s1111
      %1117 = dma.vmem_to_hbm [thread:$0]  %s1112, 256, %s8, [#allocation4], 128, 128, 8
    $region41: #{_attn_jit.1} parent=1 // pred_fallthru
      _
    // Predicated region
    $region42: #{_attn_jit.1} parent=1 // pred_check
      _
    $region43: #{_attn_jit.1} parent=1 // pred_check_branch
      %1119 = sbr.rel (0) target = $region45
    $region44: #{_attn_jit.1} parent=1 // pred_region
      %1120 = dma.done [#allocation4], 256
    $region45: #{_attn_jit.1} parent=1 // pred_fallthru
      _
    %1121 = vsyncpa [#allocation3], 1
    %1122 = vsyncpa [#allocation4], 1

</llo_original>
